<compile_context>
chip_gen: v6e
topology: v6e:2x2x1
jax: 0.10.0
libtpu: 0.0.40
codegen_flags: <defaults>
</compile_context>

<pallas_src>
import functools

import jax
import jax.numpy as jnp
from jax.experimental import pallas as pl
from jax.experimental.pallas import tpu as pltpu


def _graphconv_kernel(adj_ref, x_ref, w_ref, b_ref, out_ref, *, xw_first):
    # adj_ref: (Bblk, TM, N_pad)   x_ref: (Bblk, N_pad, F_in)
    # w_ref:   (F_in, F_pad)       b_ref: (1, F_pad)
    # out_ref: (Bblk, TM, F_pad)
    Bblk, TM, Np = adj_ref.shape
    F_in = x_ref.shape[-1]
    F_pad = w_ref.shape[-1]
    w = w_ref[...]

    if xw_first:
        # y = adj @ (x @ W): only selected when TM == N_pad (no per-row-tile
        # recompute) and F_pad <= F_in (shrinks the dominant adj matmul).
        x2 = x_ref[...].reshape(Bblk * Np, F_in)
        xw = jnp.dot(x2, w, preferred_element_type=jnp.float32)
        xw = xw.astype(x_ref.dtype).reshape(Bblk, Np, F_pad)
        y = jnp.einsum("bmn,bno->bmo", adj_ref[...], xw,
                       preferred_element_type=jnp.float32)
    else:
        # y = (adj @ x) @ W: adj matmul at width F_in, then ONE merged
        # (Bblk*TM, F_in) @ (F_in, F_pad) MXU call for the weight matmul.
        t = jnp.einsum("bmn,bnf->bmf", adj_ref[...], x_ref[...],
                       preferred_element_type=jnp.float32)
        t = t.astype(x_ref.dtype).reshape(Bblk * TM, F_in)
        y = jnp.dot(t, w, preferred_element_type=jnp.float32)
        y = y.reshape(Bblk, TM, F_pad)

    y = y + b_ref[...].astype(jnp.float32).reshape(1, 1, F_pad)
    out_ref[...] = y.astype(out_ref.dtype)


def _param_spec(shape, buffering):
    """BlockSpec for a constant (grid-invariant) parameter block."""
    index_map = lambda b, m: (0,) * len(shape)
    if buffering is None:
        return pl.BlockSpec(shape, index_map)
    return pl.BlockSpec(shape, index_map, pipeline_mode=buffering)


def graph_conv(x, adj, weight, bias):
    """Pallas implementation of GraphConv.forward (default module flags)."""
    B, N, F_in = x.shape
    F_out = weight.shape[1]
    assert adj.shape == (B, N, N)
    dtype = x.dtype

    # ---- Chip-aware VMEM budget --------------------------------------------
    try:
        vmem_cap = int(pltpu.get_tpu_info().vmem_capacity_bytes)
    except Exception:
        vmem_cap = 64 * 1024 * 1024  # v7x physical minimum; safe everywhere
    vmem_limit = int(0.75 * vmem_cap)       # ~96 MiB v5e/v6e, ~48 MiB v7x
    block_budget = int(0.80 * vmem_limit)   # headroom for compiler temporaries

    # ---- Output feature padding (lane-dense stores, only if <= 2x inflation)
    F_ceil = pl.cdiv(F_out, 128) * 128
    F_pad = F_ceil if F_ceil <= 2 * F_out else F_out
    if F_pad != F_out:
        weight = jnp.pad(weight, ((0, 0), (0, F_pad - F_out)))
        bias = jnp.pad(bias, (0, F_pad - F_out))
    bias2d = bias.reshape(1, F_pad)

    adj_it = adj.dtype.itemsize
    x_it = x.dtype.itemsize
    out_it = jnp.dtype(dtype).itemsize
    w_it = weight.dtype.itemsize

    def _vmem_bytes(bblk, tm):
        # Total per-step VMEM footprint estimate.
        blocks = 2 * bblk * (tm * N_pad * adj_it        # adj tile (double buffered)
                             + N_pad * F_in * x_it      # x rows block
                             + tm * F_pad * out_it)     # output tile
        params = 2 * (F_in * F_pad * w_it + F_pad * 4)  # weight + bias (conservative)
        temps = 2 * bblk * tm * max(F_in, F_pad) * 4    # f32 matmul intermediates
        return blocks + params + temps

    # ---- Node padding and row tile TM --------------------------------------
    if N <= 512:
        # Small / medium graphs: single full-row block (no row tiling).
        N_pad = N
        TM = N
    else:
        # Large graphs: pad nodes (zero rows/cols) to a multiple of 256 so the
        # contraction feeds the 256x256 MXU, and pick the biggest row tile
        # that fits the VMEM budget.
        N_pad = pl.cdiv(N, 256) * 256
        TM = 128
        for cand in (512, 256):
            if N_pad % cand == 0 and _vmem_bytes(1, cand) <= block_budget:
                TM = cand
                break
        # TODO(synk): if even TM=128 / Bblk=1 exceeds the budget (huge F_in),
        #             tile the contraction axis with an f32 VMEM accumulator.

    n_m = N_pad // TM
    if N_pad != N:
        adj = jnp.pad(adj, ((0, 0), (0, N_pad - N), (0, N_pad - N)))
        x = jnp.pad(x, ((0, 0), (0, N_pad - N), (0, 0)))

    # ---- Graphs per grid step ----------------------------------------------
    fixed = _vmem_bytes(0, TM)
    per_graph = _vmem_bytes(1, TM) - fixed
    Bblk = int(max(1, min(B, 256, (block_budget - fixed) // per_graph)))
    if n_m == 1 and B > 1:
        # Keep >= 2 grid programs so both v7x TensorCores get work.
        Bblk = min(Bblk, pl.cdiv(B, 2))
    B_pad = pl.cdiv(B, Bblk) * Bblk
    if B_pad != B:
        adj = jnp.pad(adj, ((0, B_pad - B), (0, 0), (0, 0)))
        x = jnp.pad(x, ((0, B_pad - B), (0, 0), (0, 0)))

    # Reassociate to adj @ (x @ W) only when it shrinks the dominant matmul
    # AND there is no per-row-tile recompute of x @ W.
    xw_first = (F_pad <= F_in) and (TM == N_pad)

    kernel = functools.partial(_graphconv_kernel, xw_first=xw_first)

    def _run(param_buffering):
        grid_spec = pltpu.PrefetchScalarGridSpec(
            num_scalar_prefetch=0,
            grid=(B_pad // Bblk, n_m),
            in_specs=[
                pl.BlockSpec((Bblk, TM, N_pad), lambda b, m: (b, m, 0)),    # adj
                pl.BlockSpec((Bblk, N_pad, F_in), lambda b, m: (b, 0, 0)),  # x
                _param_spec((F_in, F_pad), param_buffering),                # weight
                _param_spec((1, F_pad), param_buffering),                   # bias
            ],
            out_specs=pl.BlockSpec((Bblk, TM, F_pad), lambda b, m: (b, m, 0)),
        )
        return pl.pallas_call(
            kernel,
            out_shape=jax.ShapeDtypeStruct((B_pad, N_pad, F_pad), dtype),
            grid_spec=grid_spec,
            compiler_params=pltpu.CompilerParams(
                dimension_semantics=("parallel", "parallel"),
                vmem_limit_bytes=vmem_limit,
            ),
        )(adj, x, weight, bias2d)

    try:
        # Weight / bias have constant index maps: fetch once, single-buffered.
        out = _run(pl.Buffered(1))
    except Exception:
        # Fallback for jax versions where pipeline_mode=Buffered(1) is not
        # supported on the top-level pallas_call pipeline.
        out = _run(None)

    if (B_pad, N_pad, F_pad) != (B, N, F_out):
        out = out[:B, :N, :F_out]
    return out


if __name__ == "__main__":
    import numpy as np

    root = jax.random.PRNGKey(0)

    def check(idx, name, B, N, F_in, F_out, tol):
        k_x, k_a, k_w, k_b = jax.random.split(jax.random.fold_in(root, idx), 4)
        x = jax.random.normal(k_x, (B, N, F_in), dtype=jnp.float32)
        a = jax.random.uniform(k_a, (B, N, N), dtype=jnp.float32)
        adj = 0.5 * (a + jnp.transpose(a, (0, 2, 1)))   # symmetric, nonnegative
        w = 0.1 * jax.random.normal(k_w, (F_in, F_out), dtype=jnp.float32)
        b = 0.1 * jax.random.normal(k_b, (F_out,), dtype=jnp.float32)

        y = jax.block_until_ready(graph_conv(x, adj, w, b))
        assert y.shape == (B, N, F_out), (name, y.shape)

        # Host float64 reference: y = adj @ x @ W + bias.
        xd, ad, wd, bd = (np.asarray(v, dtype=np.float64) for v in (x, adj, w, b))
        y_ref = ad @ xd @ wd + bd
        err = np.max(np.abs(np.asarray(y, dtype=np.float64) - y_ref))
        scale = np.max(np.abs(y_ref)) + 1e-6
        assert err / scale < tol, (name, float(err), float(scale))

    # Small shapes consistent with the module's batched-graph forward.
    check(0, "base", B=2, N=16, F_in=32, F_out=32, tol=1e-3)
    # Exercises the (adj @ x) @ W association and an unpadded output width.
    check(1, "adj_first", B=2, N=16, F_in=32, F_out=40, tol=1e-3)
    # Exercises node padding, row tiling, Bblk > 1 and F_out -> 128 padding.
    check(2, "row_tiled", B=3, N=576, F_in=48, F_out=96, tol=5e-3)

    print("KERNEL_OK")
</pallas_src>

<mosaic_0001>
module attributes {stable_mosaic.version = 11 : i64} {
  func.func @_graphconv_kernel(%arg0: i32, %arg1: i32, %arg2: memref<1x16x16xf32, #tpu.memory_space<vmem>>, %arg3: memref<1x16x32xf32, #tpu.memory_space<vmem>>, %arg4: memref<32x32xf32, #tpu.memory_space<vmem>>, %arg5: memref<1x32xf32, #tpu.memory_space<vmem>>, %arg6: memref<1x16x32xf32, #tpu.memory_space<vmem>>) attributes {dimension_semantics = [#tpu.dimension_semantics<parallel>, #tpu.dimension_semantics<parallel>], iteration_bounds = array<i64: 2, 1>, scalar_prefetch = 0 : i64, scratch_operands = 0 : i64, tpu.core_type = #tpu.core_type<tc>, window_params = [{transform_indices = @transform_0, window_bounds = array<i64: 1, 16, 16>}, {transform_indices = @transform_1, window_bounds = array<i64: 1, 16, 32>}, {pipeline_mode = #tpu.pipeline_mode<synchronous>, transform_indices = @transform_2, window_bounds = array<i64: 32, 32>}, {pipeline_mode = #tpu.pipeline_mode<synchronous>, transform_indices = @transform_3, window_bounds = array<i64: 1, 32>}, {transform_indices = @transform_4, window_bounds = array<i64: 1, 16, 32>}]} {
    %c0 = arith.constant 0 : index
    %c0_0 = arith.constant 0 : index
    %0 = vector.load %arg4[%c0, %c0_0] : memref<32x32xf32, #tpu.memory_space<vmem>>, vector<32x32xf32>
    %c0_1 = arith.constant 0 : index
    %c0_2 = arith.constant 0 : index
    %c0_3 = arith.constant 0 : index
    %1 = vector.load %arg3[%c0_1, %c0_2, %c0_3] : memref<1x16x32xf32, #tpu.memory_space<vmem>>, vector<1x16x32xf32>
    %2 = vector.shape_cast %1 : vector<1x16x32xf32> to vector<16x32xf32>
    %cst = arith.constant dense<0.000000e+00> : vector<16x32xf32>
    %3 = tpu.matmul %2, %0, %cst {dimension_numbers = #tpu.dot_dimension_numbers<[1], [0], [0], [1], [0, 0, 1, 1], [], []>} : vector<16x32xf32>, vector<32x32xf32>, vector<16x32xf32> -> vector<16x32xf32>
    %4 = vector.shape_cast %3 : vector<16x32xf32> to vector<1x16x32xf32>
    %c0_4 = arith.constant 0 : index
    %c0_5 = arith.constant 0 : index
    %c0_6 = arith.constant 0 : index
    %5 = vector.load %arg2[%c0_4, %c0_5, %c0_6] : memref<1x16x16xf32, #tpu.memory_space<vmem>>, vector<1x16x16xf32>
    "tpu.trace_start"() <{level = 10 : i32, message = "bmn,bno->bmo"}> : () -> ()
    %cst_7 = arith.constant dense<0.000000e+00> : vector<1x16x32xf32>
    %6 = tpu.matmul %5, %4, %cst_7 {dimension_numbers = #tpu.dot_dimension_numbers<[2], [1], [1], [2], [0, 0, 0, 1, 1, 2], [0], [0]>} : vector<1x16x16xf32>, vector<1x16x32xf32>, vector<1x16x32xf32> -> vector<1x16x32xf32>
    "tpu.trace_stop"() : () -> ()
    %c0_8 = arith.constant 0 : index
    %c0_9 = arith.constant 0 : index
    %7 = vector.load %arg5[%c0_8, %c0_9] : memref<1x32xf32, #tpu.memory_space<vmem>>, vector<1x32xf32>
    %8 = vector.shape_cast %7 : vector<1x32xf32> to vector<1x1x32xf32>
    %9 = vector.broadcast %8 : vector<1x1x32xf32> to vector<1x16x32xf32>
    %10 = arith.addf %6, %9 : vector<1x16x32xf32>
    %c0_10 = arith.constant 0 : index
    %c0_11 = arith.constant 0 : index
    %c0_12 = arith.constant 0 : index
    %11 = vector.load %arg6[%c0_10, %c0_11, %c0_12] : memref<1x16x32xf32, #tpu.memory_space<vmem>>, vector<1x16x32xf32>
    tpu.vector_store %arg6[%c0_10, %c0_11, %c0_12], %10 {strides = array<i32>} : memref<1x16x32xf32, #tpu.memory_space<vmem>>, vector<1x16x32xf32>,
    return
  }
  func.func @transform_0(%arg0: i32, %arg1: i32) -> (i32, i32, i32) {
    %c0_i32 = arith.constant 0 : i32
    %c0_i32_0 = arith.constant 0 : i32
    return %arg0, %arg1, %c0_i32 : i32, i32, i32
  }
  func.func @transform_1(%arg0: i32, %arg1: i32) -> (i32, i32, i32) {
    %c0_i32 = arith.constant 0 : i32
    %c0_i32_0 = arith.constant 0 : i32
    %c0_i32_1 = arith.constant 0 : i32
    return %arg0, %c0_i32, %c0_i32_0 : i32, i32, i32
  }
  func.func @transform_2(%arg0: i32, %arg1: i32) -> (i32, i32) {
    %c0_i32 = arith.constant 0 : i32
    %c0_i32_0 = arith.constant 0 : i32
    %c0_i32_1 = arith.constant 0 : i32
    return %c0_i32, %c0_i32_0 : i32, i32
  }
  func.func @transform_3(%arg0: i32, %arg1: i32) -> (i32, i32) {
    %c0_i32 = arith.constant 0 : i32
    %c0_i32_0 = arith.constant 0 : i32
    %c0_i32_1 = arith.constant 0 : i32
    return %c0_i32, %c0_i32_0 : i32, i32
  }
  func.func @transform_4(%arg0: i32, %arg1: i32) -> (i32, i32, i32) {
    %c0_i32 = arith.constant 0 : i32
    %c0_i32_0 = arith.constant 0 : i32
    return %arg0, %arg1, %c0_i32 : i32, i32, i32
  }
}

module attributes {stable_mosaic.version = 11 : i64} {
  func.func @_graphconv_kernel(%arg0: i32, %arg1: i32, %arg2: memref<1x16x16xf32, #tpu.memory_space<vmem>>, %arg3: memref<1x16x32xf32, #tpu.memory_space<vmem>>, %arg4: memref<32x32xf32, #tpu.memory_space<vmem>>, %arg5: memref<1x32xf32, #tpu.memory_space<vmem>>, %arg6: memref<1x16x32xf32, #tpu.memory_space<vmem>>) attributes {dimension_semantics = [#tpu.dimension_semantics<parallel>, #tpu.dimension_semantics<parallel>], iteration_bounds = array<i64: 2, 1>, scalar_prefetch = 0 : i64, scratch_operands = 0 : i64, tpu.core_type = #tpu.core_type<tc>, window_params = [{transform_indices = @transform_0, window_bounds = array<i64: 1, 16, 16>}, {transform_indices = @transform_1, window_bounds = array<i64: 1, 16, 32>}, {pipeline_mode = #tpu.pipeline_mode<synchronous>, transform_indices = @transform_2, window_bounds = array<i64: 32, 32>}, {pipeline_mode = #tpu.pipeline_mode<synchronous>, transform_indices = @transform_3, window_bounds = array<i64: 1, 32>}, {transform_indices = @transform_4, window_bounds = array<i64: 1, 16, 32>}]} {
    %c0 = arith.constant 0 : index
    %c0_0 = arith.constant 0 : index
    %0 = vector.load %arg4[%c0, %c0_0] : memref<32x32xf32, #tpu.memory_space<vmem>>, vector<32x32xf32>
    %c0_1 = arith.constant 0 : index
    %c0_2 = arith.constant 0 : index
    %c0_3 = arith.constant 0 : index
    %1 = vector.load %arg3[%c0_1, %c0_2, %c0_3] : memref<1x16x32xf32, #tpu.memory_space<vmem>>, vector<1x16x32xf32>
    %2 = vector.shape_cast %1 : vector<1x16x32xf32> to vector<16x32xf32>
    %cst = arith.constant dense<0.000000e+00> : vector<16x32xf32>
    %3 = tpu.matmul %2, %0, %cst {dimension_numbers = #tpu.dot_dimension_numbers<[1], [0], [0], [1], [0, 0, 1, 1], [], []>} : vector<16x32xf32>, vector<32x32xf32>, vector<16x32xf32> -> vector<16x32xf32>
    %4 = vector.shape_cast %3 : vector<16x32xf32> to vector<1x16x32xf32>
    %c0_4 = arith.constant 0 : index
    %c0_5 = arith.constant 0 : index
    %c0_6 = arith.constant 0 : index
    %5 = vector.load %arg2[%c0_4, %c0_5, %c0_6] : memref<1x16x16xf32, #tpu.memory_space<vmem>>, vector<1x16x16xf32>
    "tpu.trace_start"() <{level = 10 : i32, message = "bmn,bno->bmo"}> : () -> ()
    %cst_7 = arith.constant dense<0.000000e+00> : vector<1x16x32xf32>
    %6 = tpu.matmul %5, %4, %cst_7 {dimension_numbers = #tpu.dot_dimension_numbers<[2], [1], [1], [2], [0, 0, 0, 1, 1, 2], [0], [0]>} : vector<1x16x16xf32>, vector<1x16x32xf32>, vector<1x16x32xf32> -> vector<1x16x32xf32>
    "tpu.trace_stop"() : () -> ()
    %c0_8 = arith.constant 0 : index
    %c0_9 = arith.constant 0 : index
    %7 = vector.load %arg5[%c0_8, %c0_9] : memref<1x32xf32, #tpu.memory_space<vmem>>, vector<1x32xf32>
    %8 = vector.shape_cast %7 : vector<1x32xf32> to vector<1x1x32xf32>
    %9 = vector.broadcast %8 : vector<1x1x32xf32> to vector<1x16x32xf32>
    %10 = arith.addf %6, %9 : vector<1x16x32xf32>
    %c0_10 = arith.constant 0 : index
    %c0_11 = arith.constant 0 : index
    %c0_12 = arith.constant 0 : index
    %11 = vector.load %arg6[%c0_10, %c0_11, %c0_12] : memref<1x16x32xf32, #tpu.memory_space<vmem>>, vector<1x16x32xf32>
    tpu.vector_store %arg6[%c0_10, %c0_11, %c0_12], %10 {strides = array<i32>} : memref<1x16x32xf32, #tpu.memory_space<vmem>>, vector<1x16x32xf32>,
    return
  }
  func.func @transform_0(%arg0: i32, %arg1: i32) -> (i32, i32, i32) {
    %c0_i32 = arith.constant 0 : i32
    %c0_i32_0 = arith.constant 0 : i32
    return %arg0, %arg1, %c0_i32 : i32, i32, i32
  }
  func.func @transform_1(%arg0: i32, %arg1: i32) -> (i32, i32, i32) {
    %c0_i32 = arith.constant 0 : i32
    %c0_i32_0 = arith.constant 0 : i32
    %c0_i32_1 = arith.constant 0 : i32
    return %arg0, %c0_i32, %c0_i32_0 : i32, i32, i32
  }
  func.func @transform_2(%arg0: i32, %arg1: i32) -> (i32, i32) {
    %c0_i32 = arith.constant 0 : i32
    %c0_i32_0 = arith.constant 0 : i32
    %c0_i32_1 = arith.constant 0 : i32
    return %c0_i32, %c0_i32_0 : i32, i32
  }
  func.func @transform_3(%arg0: i32, %arg1: i32) -> (i32, i32) {
    %c0_i32 = arith.constant 0 : i32
    %c0_i32_0 = arith.constant 0 : i32
    %c0_i32_1 = arith.constant 0 : i32
    return %c0_i32, %c0_i32_0 : i32, i32
  }
  func.func @transform_4(%arg0: i32, %arg1: i32) -> (i32, i32, i32) {
    %c0_i32 = arith.constant 0 : i32
    %c0_i32_0 = arith.constant 0 : i32
    return %arg0, %arg1, %c0_i32 : i32, i32, i32
  }
}

</mosaic_0001>

<llo_original>
// kernel: tpu_custom_call.1
$region0: #{tpu_custom_call.1}
  #allocation0 [shape = 'u32[]', space=smem, size = 0x4, offset = 0x4, fixed_abs, tag = 'smem constant byte address 0x4 - core index']
  #allocation1 [shape = 'u32[144,128]{1,0:T(1,128)}', space=vmem, size = 0x12000, scoped, tag = 'internal scratch']
  %s0 = inlined_call_operand.hbm [shape: f32[2,16,16], index: 0, kind: input, shape index: {}]
  %s1 = inlined_call_operand.hbm [shape: f32[2,16,32], index: 1, kind: input, shape index: {}]
  %s2 = inlined_call_operand.hbm [shape: f32[32,32], index: 2, kind: input, shape index: {}]
  %s3 = inlined_call_operand.vmem [shape: f32[1,32], index: 3, kind: input, shape index: {}]
  %s4 = inlined_call_operand.hbm [shape: f32[2,16,32], index: 4, kind: output, shape index: {}]
  %s5 = sld [smem:[#allocation0]]
  $region61: #{tpu_custom_call.1} parent=0
    _
  %s7 = ssub.s32 1, %s5
  %s8 = scalar_select 0, %s7, %s5
  $region1: #{tpu_custom_call.1} parent=0
    #allocation2 [shape = 'u8[16384]{0}', space=vmem, size = 0x4000, scoped, tag = 'input window, operand 0']
    #allocation3 [shape = 's32[2]{0}', space=sflag, size = 0x8, scoped, tag = 'scoped memory for tpu_custom_call.1']
    #allocation4 [shape = 's32[2]{0}', space=sflag, size = 0x8, scoped, tag = 'scoped memory for tpu_custom_call.1']
    #allocation5 [shape = 'u8[16384]{0}', space=vmem, size = 0x4000, scoped, tag = 'input window, operand 1']
    #allocation6 [shape = 's32[2]{0}', space=sflag, size = 0x8, scoped, tag = 'scoped memory for tpu_custom_call.1']
    #allocation7 [shape = 'u8[16384]{0}', space=vmem, size = 0x4000, scoped, tag = 'input window, operand 2, single buffered']
    #allocation8 [shape = 'u8[16384]{0}', space=vmem, size = 0x4000, scoped, tag = 'output window, operand 0']
    %9 = vsyncpa [#allocation3], 0
    %s10 = scalar_lea.sflag [#allocation3], 1
    %11 = vsyncpa %s10, 0
    %12 = vsyncpa [#allocation6], 0
    %s13 = scalar_lea.sflag [#allocation6], 1
    %14 = vsyncpa %s13, 0
    %15 = vsyncpa [#allocation4], 0
    %s16 = scalar_lea.sflag [#allocation4], 1
    %17 = vsyncpa %s16, 0
    loop: start=0, step=1, limit=4
    $region2: #{tpu_custom_call.1} parent=1 // loop_pre_header
      _
    $region3: #{tpu_custom_call.1} parent=1 // loop_header
      %s19 = sphi 0, %s23
      %p20 = scmp.ge.s32.totalorder %s19, 4
      %s26 = sphi 0, %s38
      %s27 = sphi 0, %s34
      %s28 = sphi 0, %s26
      %s29 = sphi 0, %s27
      %s30 = sphi 0, %s28
      %s31 = sphi 0, %s29
      %s43 = sphi 0, %s45
      %s46 = sphi 0, %s43
      %s47 = sphi 0, %s46
      %s63 = sphi 0, %s47
      %s69 = sphi 0, %s71
      %s72 = sphi 0, %s69
      %s73 = sphi 0, %s72
      %s89 = sphi 0, %s73
      %s93 = sphi 0, %s93
      %s95 = sphi 0, %s93
      %s96 = sphi 0, %s95
      %s110 = sphi 0, %s96
      %s114 = sphi 0, %s114
      %s116 = sphi 0, %s114
      %s117 = sphi 0, %s116
      %s131 = sphi 0, %s117
      %s139 = sphi 0, %s141
      %s142 = sphi 0, %s139
      %s143 = sphi 0, %s142
      %s159 = sphi 0, %s143
    $region4: #{tpu_custom_call.1} parent=1 // loop_header_branch
      %22 = sbr.rel (%p20) target = $region8
    $region5: #{tpu_custom_call.1} parent=1 // loop_body
      %s24 = ssub.s32 %s19, 1
      %s25 = ssub.s32 %s19, 2
      %s32 = sadd.s32 1, %s27
      %p33 = scmp.ge.s32.totalorder %s32, 1
      %s34 = scalar_select %p33, 0, %s32
      %s35 = sadd.s32 1, %s26
      %s36 = scalar_select %p33, %s35, %s26
      %p37 = scmp.ge.s32.totalorder %s36, 2
      %s38 = scalar_select %p37, 0, %s36
      %s39 = ssub.s32 %s26, %s38
      %s40 = ssub.s32 %s27, %s34
      %s41 = sor.u32 %s39, %s40
      %p42 = scmp.eq.s32.totalorder %s41, 0
      %s44 = sadd.s32 %s43, 1
      %s45 = scalar_select %p42, %s43, %s44
      %p48 = pneg %p42
      %p49 = scmp.eq.s32.totalorder %s19, 1
      %p50 = por %p48, %p49
      %p51 = scmp.ne.s32.totalorder %s43, %s46
      %p52 = scmp.eq.s32.totalorder %s19, 0
      %p53 = por %p51, %p52
      %p54 = scmp.ne.s32.totalorder %s43, %s46
      %p55 = scmp.eq.s32.totalorder %s24, 1
      %p56 = por %p54, %p55
      %p57 = scmp.ne.s32.totalorder %s46, %s47
      %p58 = scmp.eq.s32.totalorder %s24, 0
      %p59 = por %p57, %p58
      %p60 = scmp.ne.s32.totalorder %s46, %s47
      %p61 = scmp.eq.s32.totalorder %s25, 1
      %p62 = por %p60, %p61
      %p64 = scmp.ne.s32.totalorder %s47, %s63
      %p65 = scmp.eq.s32.totalorder %s25, 0
      %p66 = por %p64, %p65
      %s67 = ssub.s32 %s26, %s38
      %p68 = scmp.eq.s32.totalorder %s67, 0
      %s70 = sadd.s32 %s69, 1
      %s71 = scalar_select %p68, %s69, %s70
      %p74 = pneg %p68
      %p75 = scmp.eq.s32.totalorder %s19, 1
      %p76 = por %p74, %p75
      %p77 = scmp.ne.s32.totalorder %s69, %s72
      %p78 = scmp.eq.s32.totalorder %s19, 0
      %p79 = por %p77, %p78
      %p80 = scmp.ne.s32.totalorder %s69, %s72
      %p81 = scmp.eq.s32.totalorder %s24, 1
      %p82 = por %p80, %p81
      %p83 = scmp.ne.s32.totalorder %s72, %s73
      %p84 = scmp.eq.s32.totalorder %s24, 0
      %p85 = por %p83, %p84
      %p86 = scmp.ne.s32.totalorder %s72, %s73
      %p87 = scmp.eq.s32.totalorder %s25, 1
      %p88 = por %p86, %p87
      %p90 = scmp.ne.s32.totalorder %s73, %s89
      %p91 = scmp.eq.s32.totalorder %s25, 0
      %p92 = por %p90, %p91
      %s94 = sadd.s32 %s93, 1
      %p97 = scmp.eq.s32.totalorder %s19, 1
      %p98 = scmp.ne.s32.totalorder %s93, %s95
      %p99 = scmp.eq.s32.totalorder %s19, 0
      %p100 = por %p98, %p99
      %p101 = scmp.ne.s32.totalorder %s93, %s95
      %p102 = scmp.eq.s32.totalorder %s24, 1
      %p103 = por %p101, %p102
      %p104 = scmp.ne.s32.totalorder %s95, %s96
      %p105 = scmp.eq.s32.totalorder %s24, 0
      %p106 = por %p104, %p105
      %p107 = scmp.ne.s32.totalorder %s95, %s96
      %p108 = scmp.eq.s32.totalorder %s25, 1
      %p109 = por %p107, %p108
      %p111 = scmp.ne.s32.totalorder %s96, %s110
      %p112 = scmp.eq.s32.totalorder %s25, 0
      %p113 = por %p111, %p112
      %s115 = sadd.s32 %s114, 1
      %p118 = scmp.eq.s32.totalorder %s19, 1
      %p119 = scmp.ne.s32.totalorder %s114, %s116
      %p120 = scmp.eq.s32.totalorder %s19, 0
      %p121 = por %p119, %p120
      %p122 = scmp.ne.s32.totalorder %s114, %s116
      %p123 = scmp.eq.s32.totalorder %s24, 1
      %p124 = por %p122, %p123
      %p125 = scmp.ne.s32.totalorder %s116, %s117
      %p126 = scmp.eq.s32.totalorder %s24, 0
      %p127 = por %p125, %p126
      %p128 = scmp.ne.s32.totalorder %s116, %s117
      %p129 = scmp.eq.s32.totalorder %s25, 1
      %p130 = por %p128, %p129
      %p132 = scmp.ne.s32.totalorder %s117, %s131
      %p133 = scmp.eq.s32.totalorder %s25, 0
      %p134 = por %p132, %p133
      %s135 = ssub.s32 %s26, %s38
      %s136 = ssub.s32 %s27, %s34
      %s137 = sor.u32 %s135, %s136
      %p138 = scmp.eq.s32.totalorder %s137, 0
      %s140 = sadd.s32 %s139, 1
      %s141 = scalar_select %p138, %s139, %s140
      %p144 = pneg %p138
      %p145 = scmp.eq.s32.totalorder %s19, 1
      %p146 = por %p144, %p145
      %p147 = scmp.ne.s32.totalorder %s139, %s142
      %p148 = scmp.eq.s32.totalorder %s19, 0
      %p149 = por %p147, %p148
      %p150 = scmp.ne.s32.totalorder %s139, %s142
      %p151 = scmp.eq.s32.totalorder %s24, 1
      %p152 = por %p150, %p151
      %p153 = scmp.ne.s32.totalorder %s142, %s143
      %p154 = scmp.eq.s32.totalorder %s24, 0
      %p155 = por %p153, %p154
      %p156 = scmp.ne.s32.totalorder %s142, %s143
      %p157 = scmp.eq.s32.totalorder %s25, 1
      %p158 = por %p156, %p157
      %p160 = scmp.ne.s32.totalorder %s143, %s159
      %p161 = scmp.eq.s32.totalorder %s25, 0
      %p162 = por %p160, %p161
      %p163 = scmp.le.s32.totalorder 1, %s19
      %p164 = scmp.lt.s32.totalorder %s19, 3
      %p165 = pnand %p163, %p164
      %p166 = pneg %p165
      // Predicated region
      $region9: #{tpu_custom_call.1} parent=5 // pred_check
        _
      $region10: #{tpu_custom_call.1} parent=5 // pred_check_branch
        %168 = sbr.rel (%p165) target = $region12
      $region11: #{tpu_custom_call.1} parent=5 // pred_region
        %s169 = ssub.s32 %s19, 1
        // Predicated region
        $region13: #{tpu_custom_call.1} parent=11 // pred_check
          %p170 = pneg %p106
        $region14: #{tpu_custom_call.1} parent=11 // pred_check_branch
          %172 = sbr.rel (%p170) target = $region16
        $region15: #{tpu_custom_call.1} parent=11 // pred_region
          %s174 = ssub.s32 512, 512
          %175 = vsyncadd [#allocation6], %s174
          %s176 = sshll.u32 [#allocation7], 4
          %s177 = int_to_ptr.vmem [resolvable:$true] %s176
          %182 = dma.hbm_to_vmem [thread:$0]  %s2, 512, %s177, [#allocation6], 128, 128, 8
        $region16: #{tpu_custom_call.1} parent=11 // pred_fallthru
          _
        // Predicated region
        $region17: #{tpu_custom_call.1} parent=11 // pred_check
          %p183 = pneg %p127
        $region18: #{tpu_custom_call.1} parent=11 // pred_check_branch
          %185 = sbr.rel (%p183) target = $region20
        $region19: #{tpu_custom_call.1} parent=11 // pred_region
          _
        $region20: #{tpu_custom_call.1} parent=11 // pred_fallthru
          _
      $region12: #{tpu_custom_call.1} parent=5 // pred_fallthru
        _
      %p186 = scmp.lt.s32.totalorder %s19, 2
      // Predicated region
      $region21: #{tpu_custom_call.1} parent=5 // pred_check
        %p187 = pneg %p186
      $region22: #{tpu_custom_call.1} parent=5 // pred_check_branch
        %189 = sbr.rel (%p187) target = $region24
      $region23: #{tpu_custom_call.1} parent=5 // pred_region
        // Predicated region
        $region25: #{tpu_custom_call.1} parent=23 // pred_check
          %p190 = pneg %p53
        $region26: #{tpu_custom_call.1} parent=23 // pred_check_branch
          %192 = sbr.rel (%p190) target = $region28
        $region27: #{tpu_custom_call.1} parent=23 // pred_region
          %s193 = sand.u32 %s43, 1
          %s194 = scalar_lea.sflag [#allocation3], %s193
          %s195 = sand.u32 %s43, 1
          %s196 = smul.addr %s195, 16
          %s197 = scalar_lea.vmem [#allocation2], %s196
          %s198 = smul.u32 2, %s27
          %s200 = ssub.s32 256, 256
          %201 = vsyncadd %s194, %s200
          %s202 = smul.addr %s26, 2
          %s203 = sadd.s32 %s198, %s202
          %s204 = smul.addr %s203, 128
          %s205 = scalar_lea.hbm %s0, %s204
          %s206 = sshll.u32 %s197, 4
          %s207 = int_to_ptr.vmem [resolvable:$true] %s206
          %212 = dma.hbm_to_vmem [thread:$0]  %s205, 256, %s207, %s194, 128, 128, 8
        $region28: #{tpu_custom_call.1} parent=23 // pred_fallthru
          _
        // Predicated region
        $region29: #{tpu_custom_call.1} parent=23 // pred_check
          %p213 = pneg %p79
        $region30: #{tpu_custom_call.1} parent=23 // pred_check_branch
          %215 = sbr.rel (%p213) target = $region32
        $region31: #{tpu_custom_call.1} parent=23 // pred_region
          %s216 = sand.u32 %s19, 1
          %s217 = scalar_lea.sflag [#allocation6], %s216
          %s218 = sand.u32 %s69, 1
          %s219 = smul.addr %s218, 16
          %s220 = scalar_lea.vmem [#allocation5], %s219
          %s222 = ssub.s32 256, 256
          %223 = vsyncadd %s217, %s222
          %s224 = smul.addr %s26, 2
          %s225 = smul.addr %s224, 128
          %s226 = scalar_lea.hbm %s1, %s225
          %s227 = sshll.u32 %s220, 4
          %s228 = int_to_ptr.vmem [resolvable:$true] %s227
          %233 = dma.hbm_to_vmem [thread:$0]  %s226, 256, %s228, %s217, 128, 128, 8
        $region32: #{tpu_custom_call.1} parent=23 // pred_fallthru
          _
      $region24: #{tpu_custom_call.1} parent=5 // pred_fallthru
        _
      %p234 = scmp.le.s32.totalorder 1, %s19
      %p235 = scmp.lt.s32.totalorder %s19, 3
      %p236 = pnand %p234, %p235
      %p237 = pneg %p236
      // Predicated region
      $region33: #{tpu_custom_call.1} parent=5 // pred_check
        _
      $region34: #{tpu_custom_call.1} parent=5 // pred_check_branch
        %239 = sbr.rel (%p236) target = $region36
      $region35: #{tpu_custom_call.1} parent=5 // pred_region
        %s240 = ssub.s32 %s19, 1
        %s241 = sand.u32 %s46, 1
        %s242 = scalar_lea.sflag [#allocation3], %s241
        %s243 = sand.u32 %s46, 1
        %s244 = smul.addr %s243, 16
        %s245 = scalar_lea.vmem [#allocation2], %s244
        // Predicated region
        $region37: #{tpu_custom_call.1} parent=35 // pred_check
          %p246 = pneg %p59
        $region38: #{tpu_custom_call.1} parent=35 // pred_check_branch
          %248 = sbr.rel (%p246) target = $region40
        $region39: #{tpu_custom_call.1} parent=35 // pred_region
          %249 = dma.done %s242, 256
        $region40: #{tpu_custom_call.1} parent=35 // pred_fallthru
          _
        %s250 = sand.u32 %s24, 1
        %s251 = scalar_lea.sflag [#allocation6], %s250
        %s252 = sand.u32 %s72, 1
        %s253 = smul.addr %s252, 16
        %s254 = scalar_lea.vmem [#allocation5], %s253
        // Predicated region
        $region41: #{tpu_custom_call.1} parent=35 // pred_check
          %p255 = pneg %p85
        $region42: #{tpu_custom_call.1} parent=35 // pred_check_branch
          %257 = sbr.rel (%p255) target = $region44
        $region43: #{tpu_custom_call.1} parent=35 // pred_region
          %258 = dma.done %s251, 256
        $region44: #{tpu_custom_call.1} parent=35 // pred_fallthru
          _
        // Predicated region
        $region45: #{tpu_custom_call.1} parent=35 // pred_check
          %p259 = pneg %p106
        $region46: #{tpu_custom_call.1} parent=35 // pred_check_branch
          %261 = sbr.rel (%p259) target = $region48
        $region47: #{tpu_custom_call.1} parent=35 // pred_region
          %262 = dma.done [#allocation6], 512
        $region48: #{tpu_custom_call.1} parent=35 // pred_fallthru
          _
        %s263 = sand.u32 %s46, 1
        %s264 = scalar_lea.sflag [#allocation3], %s263
        %s265 = sand.u32 %s46, 1
        %s266 = smul.addr %s265, 16
        %s267 = scalar_lea.vmem [#allocation2], %s266
        %p268 = pneg %p59
        %p269 = pneg %p56
        %s270 = sand.u32 %s24, 1
        %s271 = scalar_lea.sflag [#allocation6], %s270
        %s272 = sand.u32 %s72, 1
        %s273 = smul.addr %s272, 16
        %s274 = scalar_lea.vmem [#allocation5], %s273
        %p275 = pneg %p85
        %p276 = pneg %p82
        %p277 = pneg %p106
        %p278 = pneg %p103
        %p279 = pneg %p127
        %p280 = pneg %p124
        %p281 = pneg %p155
        %p282 = pneg %p152
        %s283 = sand.u32 %s142, 1
        %s284 = scalar_lea.sflag [#allocation4], %s283
        %s285 = sand.u32 %s142, 1
        %s286 = smul.addr %s285, 16
        %s287 = scalar_lea.vmem [#allocation8], %s286
        %s288 = smul.u32 2, %s29
        %s289 = smul.u32 2, %s29
        %v290 = vld [vmem:[#allocation7] sm:$0xff]
        %v291 = vld [vmem:[#allocation7 + $0x8] sm:$0xff]
        %v292 = vld [vmem:[#allocation7 + $0x10] sm:$0xff]
        %v293 = vld [vmem:[#allocation7 + $0x18] sm:$0xff]
        %v294 = vld [vmem:[%s254] sm:$0xff]
        %v295 = vld [vmem:[%s254 + $0x8] sm:$0xff]
        %vm296 = vcmask 261120
        %v298 = vsel %vm296, %v294, 0
        %v301 = vsel %vm296, %v295, 0
        %303 = vmatprep.subr.mxu0 0.0
        %304 = vmatpush1.msra.mxu0 0.0
        %305 = vmatprep.subr.mxu0 0.0
        %306 = vmatpush1.msra.mxu0 0.0
        %307 = vmatprep.subr.mxu0 0.0
        %308 = vmatpush1.msra.mxu0 0.0
        %309 = vmatprep.subr.mxu0 0.0
        %310 = vmatpush1.msra.mxu0 0.0
        %311 = vmatprep.subr.mxu0 0.0
        %312 = vmatpush1.msra.mxu0 0.0
        %313 = vmatprep.subr.mxu0 0.0
        %314 = vmatpush1.msra.mxu0 0.0
        %315 = vmatprep.subr.mxu0 0.0
        %316 = vmatpush1.msra.mxu0 0.0
        %317 = vmatprep.subr.mxu0 0.0
        %318 = vmatpush1.msra.mxu0 0.0
        %319 = vmatprep.subr.mxu0 0.0
        %320 = vmatpush1.msra.mxu0 0.0
        %321 = vmatprep.subr.mxu0 0.0
        %322 = vmatpush1.msra.mxu0 0.0
        %323 = vmatprep.subr.mxu0 0.0
        %324 = vmatpush1.msra.mxu0 0.0
        %325 = vmatprep.subr.mxu0 0.0
        %326 = vmatpush1.msra.mxu0 0.0
        %327 = vmatprep.subr.mxu0 0.0
        %328 = vmatpush1.msra.mxu0 %v293
        %329 = vmatprep.subr.mxu0 0.0
        %330 = vmatpush1.msra.mxu0 %v292
        %331 = vmatprep.subr.mxu0 0.0
        %332 = vmatpush1.msra.mxu0 %v291
        %333 = vmatprep.subr.mxu0 0.0
        %334 = vmatpush1.msra.mxu0 %v290
        %335 = vmatprep.subr.mxu0 0.0
        %336 = vmatpush2.msra.mxu0 0.0
        %337 = vmatprep.subr.mxu0 0.0
        %338 = vmatpush2.msra.mxu0 0.0
        %339 = vmatprep.subr.mxu0 0.0
        %340 = vmatpush2.msra.mxu0 0.0
        %341 = vmatprep.subr.mxu0 0.0
        %342 = vmatpush2.msra.mxu0 0.0
        %343 = vmatprep.subr.mxu0 0.0
        %344 = vmatpush2.msra.mxu0 0.0
        %345 = vmatprep.subr.mxu0 0.0
        %346 = vmatpush2.msra.mxu0 0.0
        %347 = vmatprep.subr.mxu0 0.0
        %348 = vmatpush2.msra.mxu0 0.0
        %349 = vmatprep.subr.mxu0 0.0
        %350 = vmatpush2.msra.mxu0 0.0
        %351 = vmatprep.subr.mxu0 0.0
        %352 = vmatpush2.msra.mxu0 0.0
        %353 = vmatprep.subr.mxu0 0.0
        %354 = vmatpush2.msra.mxu0 0.0
        %355 = vmatprep.subr.mxu0 0.0
        %356 = vmatpush2.msra.mxu0 0.0
        %357 = vmatprep.subr.mxu0 0.0
        %358 = vmatpush2.msra.mxu0 0.0
        %359 = vmatprep.subr.mxu0 0.0
        %360 = vmatpush2.msra.mxu0 0.0
        %361 = vmatprep.subr.mxu0 0.0
        %362 = vmatpush2.msra.mxu0 0.0
        %363 = vmatprep.subr.mxu0 0.0
        %364 = vmatpush2.msra.mxu0 0.0
        %365 = vmatprep.subr.mxu0 0.0
        %366 = vmatpush2.msra.mxu0 0.0
        %367 = vmatprep.mubr.f32.mxu0 0.0
        %368 = vmatmul.mubr.f32.gmra.mxu0 %v298
        %v369 = vpop.f32.mrf.mxu0
        %v370 = vadd.f32 0.0, %v369
        %v371 = vpop.f32.mrf.mxu0
        %372 = vmatprep.mubr.f32.mxu0 0.0
        %373 = vmatmul.mubr.f32.gmra.mxu0 %v301
        %v374 = vpop.f32.mrf.mxu0
        %v375 = vadd.f32 0.0, %v374
        %v376 = vpop.f32.mrf.mxu0
        %377 = vdwg.mxu0
        %v378 = vld [vmem:[%s245] sm:$0xff]
        %v379 = vld [vmem:[%s245 + $0x8] sm:$0xff]
        %v380 = vld [vmem:[%s3] sm:$0x1]
        %v382 = vlaneseq
        %v383 = vshrl.u32 %v382, 7
        %v384 = vsub.s32 0, %v383
        %v385 = vrot.slane %v380, %v384
        %vm387 = vcmask 130048
        %v389 = vsel %vm387, %v378, 0
        %v392 = vsel %vm387, %v379, 0
        %394 = vmatprep.subr.mxu0 0.0
        %395 = vmatpush1.msra.mxu0 0.0
        %396 = vmatprep.subr.mxu0 0.0
        %397 = vmatpush1.msra.mxu0 0.0
        %398 = vmatprep.subr.mxu0 0.0
        %399 = vmatpush1.msra.mxu0 0.0
        %400 = vmatprep.subr.mxu0 0.0
        %401 = vmatpush1.msra.mxu0 0.0
        %402 = vmatprep.subr.mxu0 0.0
        %403 = vmatpush1.msra.mxu0 0.0
        %404 = vmatprep.subr.mxu0 0.0
        %405 = vmatpush1.msra.mxu0 0.0
        %406 = vmatprep.subr.mxu0 0.0
        %407 = vmatpush1.msra.mxu0 0.0
        %408 = vmatprep.subr.mxu0 0.0
        %409 = vmatpush1.msra.mxu0 0.0
        %410 = vmatprep.subr.mxu0 0.0
        %411 = vmatpush1.msra.mxu0 0.0
        %412 = vmatprep.subr.mxu0 0.0
        %413 = vmatpush1.msra.mxu0 0.0
        %414 = vmatprep.subr.mxu0 0.0
        %415 = vmatpush1.msra.mxu0 0.0
        %416 = vmatprep.subr.mxu0 0.0
        %417 = vmatpush1.msra.mxu0 0.0
        %418 = vmatprep.subr.mxu0 0.0
        %419 = vmatpush1.msra.mxu0 0.0
        %420 = vmatprep.subr.mxu0 0.0
        %421 = vmatpush1.msra.mxu0 0.0
        %422 = vmatprep.subr.mxu0 0.0
        %423 = vmatpush1.msra.mxu0 %v375
        %424 = vmatprep.subr.mxu0 0.0
        %425 = vmatpush1.msra.mxu0 %v370
        %426 = vmatprep.subr.mxu0 0.0
        %427 = vmatpush2.msra.mxu0 0.0
        %428 = vmatprep.subr.mxu0 0.0
        %429 = vmatpush2.msra.mxu0 0.0
        %430 = vmatprep.subr.mxu0 0.0
        %431 = vmatpush2.msra.mxu0 0.0
        %432 = vmatprep.subr.mxu0 0.0
        %433 = vmatpush2.msra.mxu0 0.0
        %434 = vmatprep.subr.mxu0 0.0
        %435 = vmatpush2.msra.mxu0 0.0
        %436 = vmatprep.subr.mxu0 0.0
        %437 = vmatpush2.msra.mxu0 0.0
        %438 = vmatprep.subr.mxu0 0.0
        %439 = vmatpush2.msra.mxu0 0.0
        %440 = vmatprep.subr.mxu0 0.0
        %441 = vmatpush2.msra.mxu0 0.0
        %442 = vmatprep.subr.mxu0 0.0
        %443 = vmatpush2.msra.mxu0 0.0
        %444 = vmatprep.subr.mxu0 0.0
        %445 = vmatpush2.msra.mxu0 0.0
        %446 = vmatprep.subr.mxu0 0.0
        %447 = vmatpush2.msra.mxu0 0.0
        %448 = vmatprep.subr.mxu0 0.0
        %449 = vmatpush2.msra.mxu0 0.0
        %450 = vmatprep.subr.mxu0 0.0
        %451 = vmatpush2.msra.mxu0 0.0
        %452 = vmatprep.subr.mxu0 0.0
        %453 = vmatpush2.msra.mxu0 0.0
        %454 = vmatprep.subr.mxu0 0.0
        %455 = vmatpush2.msra.mxu0 0.0
        %456 = vmatprep.subr.mxu0 0.0
        %457 = vmatpush2.msra.mxu0 0.0
        %458 = vmatprep.mubr.f32.mxu0 0.0
        %459 = vmatmul.mubr.f32.gmra.mxu0 %v389
        %v460 = vpop.f32.mrf.mxu0
        %v461 = vadd.f32 %v385, %v460
        %v462 = vpop.f32.mrf.mxu0
        %463 = vmatprep.mubr.f32.mxu0 0.0
        %464 = vmatmul.mubr.f32.gmra.mxu0 %v392
        %v465 = vpop.f32.mrf.mxu0
        %v466 = vadd.f32 %v385, %v465
        %v467 = vpop.f32.mrf.mxu0
        %468 = vdwg.mxu0
        %469 = vst.msk [vmem:[%s287] sm:$0xff] %vm296, %v461
        %470 = vst.msk [vmem:[%s287 + $0x8] sm:$0xff] %vm296, %v466
        %s471 = sand.u32 %s142, 1
        %s472 = scalar_lea.sflag [#allocation4], %s471
        %s473 = sand.u32 %s142, 1
        %s474 = smul.addr %s473, 16
        %s475 = scalar_lea.vmem [#allocation8], %s474
        // Predicated region
        $region49: #{tpu_custom_call.1} parent=35 // pred_check
          %p476 = pneg %p152
        $region50: #{tpu_custom_call.1} parent=35 // pred_check_branch
          %478 = sbr.rel (%p476) target = $region52
        $region51: #{tpu_custom_call.1} parent=35 // pred_region
          %s479 = smul.u32 2, %s29
          %s481 = ssub.s32 256, 256
          %482 = vsyncadd %s472, %s481
          %s483 = smul.addr %s28, 2
          %s484 = sadd.s32 %s479, %s483
          %s485 = smul.addr %s484, 128
          %s486 = scalar_lea.hbm %s4, %s485
          %s487 = sshll.u32 %s475, 4
          %s488 = int_to_ptr.vmem [resolvable:$true] %s487
          %493 = dma.vmem_to_hbm [thread:$0]  %s488, 256, %s486, %s472, 128, 128, 8
        $region52: #{tpu_custom_call.1} parent=35 // pred_fallthru
          _
      $region36: #{tpu_custom_call.1} parent=5 // pred_fallthru
        _
      %p494 = scmp.le.s32.totalorder 2, %s19
      // Predicated region
      $region53: #{tpu_custom_call.1} parent=5 // pred_check
        %p495 = pneg %p494
      $region54: #{tpu_custom_call.1} parent=5 // pred_check_branch
        %497 = sbr.rel (%p495) target = $region56
      $region55: #{tpu_custom_call.1} parent=5 // pred_region
        %s498 = ssub.s32 %s19, 2
        // Predicated region
        $region57: #{tpu_custom_call.1} parent=55 // pred_check
          %p499 = pneg %p158
        $region58: #{tpu_custom_call.1} parent=55 // pred_check_branch
          %501 = sbr.rel (%p499) target = $region60
        $region59: #{tpu_custom_call.1} parent=55 // pred_region
          %s502 = sand.u32 %s143, 1
          %s503 = scalar_lea.sflag [#allocation4], %s502
          %s504 = sand.u32 %s143, 1
          %s505 = smul.addr %s504, 16
          %s506 = scalar_lea.vmem [#allocation8], %s505
          %507 = dma.done %s503, 256
        $region60: #{tpu_custom_call.1} parent=55 // pred_fallthru
          _
      $region56: #{tpu_custom_call.1} parent=5 // pred_fallthru
        _
    $region6: #{tpu_custom_call.1} parent=1 // loop_footer
      %s23 = sadd.s32 1, %s19
    $region7: #{tpu_custom_call.1} parent=1 // loop_footer_branch
      %18 = sbr.rel target = $region3
    $region8: #{tpu_custom_call.1} parent=1 // loop_exit
      _
    %508 = vsyncpa [#allocation3], 1
    %s509 = scalar_lea.sflag [#allocation3], 1
    %510 = vsyncpa %s509, 1
    %511 = vsyncpa [#allocation6], 1
    %s512 = scalar_lea.sflag [#allocation6], 1
    %513 = vsyncpa %s512, 1
    %514 = vsyncpa [#allocation4], 1
    %s515 = scalar_lea.sflag [#allocation4], 1
    %516 = vsyncpa %s515, 1

// kernel: tpu_custom_call.1
$region0: #{tpu_custom_call.1}
  #allocation0 [shape = 'u32[]', space=smem, size = 0x4, offset = 0x4, fixed_abs, tag = 'smem constant byte address 0x4 - core index']
  #allocation1 [shape = 'u32[144,128]{1,0:T(1,128)}', space=vmem, size = 0x12000, scoped, tag = 'internal scratch']
  %s0 = inlined_call_operand.hbm [shape: f32[2,16,16], index: 0, kind: input, shape index: {}]
  %s1 = inlined_call_operand.hbm [shape: f32[2,16,32], index: 1, kind: input, shape index: {}]
  %s2 = inlined_call_operand.hbm [shape: f32[32,32], index: 2, kind: input, shape index: {}]
  %s3 = inlined_call_operand.vmem [shape: f32[1,32], index: 3, kind: input, shape index: {}]
  %s4 = inlined_call_operand.hbm [shape: f32[2,16,32], index: 4, kind: output, shape index: {}]
  %s5 = sld [smem:[#allocation0]]
  $region61: #{tpu_custom_call.1} parent=0
    _
  %s7 = ssub.s32 1, %s5
  %s8 = scalar_select 0, %s7, %s5
  $region1: #{tpu_custom_call.1} parent=0
    #allocation2 [shape = 'u8[16384]{0}', space=vmem, size = 0x4000, scoped, tag = 'input window, operand 0']
    #allocation3 [shape = 's32[2]{0}', space=sflag, size = 0x8, scoped, tag = 'scoped memory for tpu_custom_call.1']
    #allocation4 [shape = 's32[2]{0}', space=sflag, size = 0x8, scoped, tag = 'scoped memory for tpu_custom_call.1']
    #allocation5 [shape = 'u8[16384]{0}', space=vmem, size = 0x4000, scoped, tag = 'input window, operand 1']
    #allocation6 [shape = 's32[2]{0}', space=sflag, size = 0x8, scoped, tag = 'scoped memory for tpu_custom_call.1']
    #allocation7 [shape = 'u8[16384]{0}', space=vmem, size = 0x4000, scoped, tag = 'input window, operand 2, single buffered']
    #allocation8 [shape = 'u8[16384]{0}', space=vmem, size = 0x4000, scoped, tag = 'output window, operand 0']
    %9 = vsyncpa [#allocation3], 0
    %s10 = scalar_lea.sflag [#allocation3], 1
    %11 = vsyncpa %s10, 0
    %12 = vsyncpa [#allocation6], 0
    %s13 = scalar_lea.sflag [#allocation6], 1
    %14 = vsyncpa %s13, 0
    %15 = vsyncpa [#allocation4], 0
    %s16 = scalar_lea.sflag [#allocation4], 1
    %17 = vsyncpa %s16, 0
    loop: start=0, step=1, limit=4
    $region2: #{tpu_custom_call.1} parent=1 // loop_pre_header
      _
    $region3: #{tpu_custom_call.1} parent=1 // loop_header
      %s19 = sphi 0, %s23
      %p20 = scmp.ge.s32.totalorder %s19, 4
      %s26 = sphi 0, %s38
      %s27 = sphi 0, %s34
      %s28 = sphi 0, %s26
      %s29 = sphi 0, %s27
      %s30 = sphi 0, %s28
      %s31 = sphi 0, %s29
      %s43 = sphi 0, %s45
      %s46 = sphi 0, %s43
      %s47 = sphi 0, %s46
      %s63 = sphi 0, %s47
      %s69 = sphi 0, %s71
      %s72 = sphi 0, %s69
      %s73 = sphi 0, %s72
      %s89 = sphi 0, %s73
      %s93 = sphi 0, %s93
      %s95 = sphi 0, %s93
      %s96 = sphi 0, %s95
      %s110 = sphi 0, %s96
      %s114 = sphi 0, %s114
      %s116 = sphi 0, %s114
      %s117 = sphi 0, %s116
      %s131 = sphi 0, %s117
      %s139 = sphi 0, %s141
      %s142 = sphi 0, %s139
      %s143 = sphi 0, %s142
      %s159 = sphi 0, %s143
    $region4: #{tpu_custom_call.1} parent=1 // loop_header_branch
      %22 = sbr.rel (%p20) target = $region8
    $region5: #{tpu_custom_call.1} parent=1 // loop_body
      %s24 = ssub.s32 %s19, 1
      %s25 = ssub.s32 %s19, 2
      %s32 = sadd.s32 1, %s27
      %p33 = scmp.ge.s32.totalorder %s32, 1
      %s34 = scalar_select %p33, 0, %s32
      %s35 = sadd.s32 1, %s26
      %s36 = scalar_select %p33, %s35, %s26
      %p37 = scmp.ge.s32.totalorder %s36, 2
      %s38 = scalar_select %p37, 0, %s36
      %s39 = ssub.s32 %s26, %s38
      %s40 = ssub.s32 %s27, %s34
      %s41 = sor.u32 %s39, %s40
      %p42 = scmp.eq.s32.totalorder %s41, 0
      %s44 = sadd.s32 %s43, 1
      %s45 = scalar_select %p42, %s43, %s44
      %p48 = pneg %p42
      %p49 = scmp.eq.s32.totalorder %s19, 1
      %p50 = por %p48, %p49
      %p51 = scmp.ne.s32.totalorder %s43, %s46
      %p52 = scmp.eq.s32.totalorder %s19, 0
      %p53 = por %p51, %p52
      %p54 = scmp.ne.s32.totalorder %s43, %s46
      %p55 = scmp.eq.s32.totalorder %s24, 1
      %p56 = por %p54, %p55
      %p57 = scmp.ne.s32.totalorder %s46, %s47
      %p58 = scmp.eq.s32.totalorder %s24, 0
      %p59 = por %p57, %p58
      %p60 = scmp.ne.s32.totalorder %s46, %s47
      %p61 = scmp.eq.s32.totalorder %s25, 1
      %p62 = por %p60, %p61
      %p64 = scmp.ne.s32.totalorder %s47, %s63
      %p65 = scmp.eq.s32.totalorder %s25, 0
      %p66 = por %p64, %p65
      %s67 = ssub.s32 %s26, %s38
      %p68 = scmp.eq.s32.totalorder %s67, 0
      %s70 = sadd.s32 %s69, 1
      %s71 = scalar_select %p68, %s69, %s70
      %p74 = pneg %p68
      %p75 = scmp.eq.s32.totalorder %s19, 1
      %p76 = por %p74, %p75
      %p77 = scmp.ne.s32.totalorder %s69, %s72
      %p78 = scmp.eq.s32.totalorder %s19, 0
      %p79 = por %p77, %p78
      %p80 = scmp.ne.s32.totalorder %s69, %s72
      %p81 = scmp.eq.s32.totalorder %s24, 1
      %p82 = por %p80, %p81
      %p83 = scmp.ne.s32.totalorder %s72, %s73
      %p84 = scmp.eq.s32.totalorder %s24, 0
      %p85 = por %p83, %p84
      %p86 = scmp.ne.s32.totalorder %s72, %s73
      %p87 = scmp.eq.s32.totalorder %s25, 1
      %p88 = por %p86, %p87
      %p90 = scmp.ne.s32.totalorder %s73, %s89
      %p91 = scmp.eq.s32.totalorder %s25, 0
      %p92 = por %p90, %p91
      %s94 = sadd.s32 %s93, 1
      %p97 = scmp.eq.s32.totalorder %s19, 1
      %p98 = scmp.ne.s32.totalorder %s93, %s95
      %p99 = scmp.eq.s32.totalorder %s19, 0
      %p100 = por %p98, %p99
      %p101 = scmp.ne.s32.totalorder %s93, %s95
      %p102 = scmp.eq.s32.totalorder %s24, 1
      %p103 = por %p101, %p102
      %p104 = scmp.ne.s32.totalorder %s95, %s96
      %p105 = scmp.eq.s32.totalorder %s24, 0
      %p106 = por %p104, %p105
      %p107 = scmp.ne.s32.totalorder %s95, %s96
      %p108 = scmp.eq.s32.totalorder %s25, 1
      %p109 = por %p107, %p108
      %p111 = scmp.ne.s32.totalorder %s96, %s110
      %p112 = scmp.eq.s32.totalorder %s25, 0
      %p113 = por %p111, %p112
      %s115 = sadd.s32 %s114, 1
      %p118 = scmp.eq.s32.totalorder %s19, 1
      %p119 = scmp.ne.s32.totalorder %s114, %s116
      %p120 = scmp.eq.s32.totalorder %s19, 0
      %p121 = por %p119, %p120
      %p122 = scmp.ne.s32.totalorder %s114, %s116
      %p123 = scmp.eq.s32.totalorder %s24, 1
      %p124 = por %p122, %p123
      %p125 = scmp.ne.s32.totalorder %s116, %s117
      %p126 = scmp.eq.s32.totalorder %s24, 0
      %p127 = por %p125, %p126
      %p128 = scmp.ne.s32.totalorder %s116, %s117
      %p129 = scmp.eq.s32.totalorder %s25, 1
      %p130 = por %p128, %p129
      %p132 = scmp.ne.s32.totalorder %s117, %s131
      %p133 = scmp.eq.s32.totalorder %s25, 0
      %p134 = por %p132, %p133
      %s135 = ssub.s32 %s26, %s38
      %s136 = ssub.s32 %s27, %s34
      %s137 = sor.u32 %s135, %s136
      %p138 = scmp.eq.s32.totalorder %s137, 0
      %s140 = sadd.s32 %s139, 1
      %s141 = scalar_select %p138, %s139, %s140
      %p144 = pneg %p138
      %p145 = scmp.eq.s32.totalorder %s19, 1
      %p146 = por %p144, %p145
      %p147 = scmp.ne.s32.totalorder %s139, %s142
      %p148 = scmp.eq.s32.totalorder %s19, 0
      %p149 = por %p147, %p148
      %p150 = scmp.ne.s32.totalorder %s139, %s142
      %p151 = scmp.eq.s32.totalorder %s24, 1
      %p152 = por %p150, %p151
      %p153 = scmp.ne.s32.totalorder %s142, %s143
      %p154 = scmp.eq.s32.totalorder %s24, 0
      %p155 = por %p153, %p154
      %p156 = scmp.ne.s32.totalorder %s142, %s143
      %p157 = scmp.eq.s32.totalorder %s25, 1
      %p158 = por %p156, %p157
      %p160 = scmp.ne.s32.totalorder %s143, %s159
      %p161 = scmp.eq.s32.totalorder %s25, 0
      %p162 = por %p160, %p161
      %p163 = scmp.le.s32.totalorder 1, %s19
      %p164 = scmp.lt.s32.totalorder %s19, 3
      %p165 = pnand %p163, %p164
      %p166 = pneg %p165
      // Predicated region
      $region9: #{tpu_custom_call.1} parent=5 // pred_check
        _
      $region10: #{tpu_custom_call.1} parent=5 // pred_check_branch
        %168 = sbr.rel (%p165) target = $region12
      $region11: #{tpu_custom_call.1} parent=5 // pred_region
        %s169 = ssub.s32 %s19, 1
        // Predicated region
        $region13: #{tpu_custom_call.1} parent=11 // pred_check
          %p170 = pneg %p106
        $region14: #{tpu_custom_call.1} parent=11 // pred_check_branch
          %172 = sbr.rel (%p170) target = $region16
        $region15: #{tpu_custom_call.1} parent=11 // pred_region
          %s174 = ssub.s32 512, 512
          %175 = vsyncadd [#allocation6], %s174
          %s176 = sshll.u32 [#allocation7], 4
          %s177 = int_to_ptr.vmem [resolvable:$true] %s176
          %182 = dma.hbm_to_vmem [thread:$0]  %s2, 512, %s177, [#allocation6], 128, 128, 8
        $region16: #{tpu_custom_call.1} parent=11 // pred_fallthru
          _
        // Predicated region
        $region17: #{tpu_custom_call.1} parent=11 // pred_check
          %p183 = pneg %p127
        $region18: #{tpu_custom_call.1} parent=11 // pred_check_branch
          %185 = sbr.rel (%p183) target = $region20
        $region19: #{tpu_custom_call.1} parent=11 // pred_region
          _
        $region20: #{tpu_custom_call.1} parent=11 // pred_fallthru
          _
      $region12: #{tpu_custom_call.1} parent=5 // pred_fallthru
        _
      %p186 = scmp.lt.s32.totalorder %s19, 2
      // Predicated region
      $region21: #{tpu_custom_call.1} parent=5 // pred_check
        %p187 = pneg %p186
      $region22: #{tpu_custom_call.1} parent=5 // pred_check_branch
        %189 = sbr.rel (%p187) target = $region24
      $region23: #{tpu_custom_call.1} parent=5 // pred_region
        // Predicated region
        $region25: #{tpu_custom_call.1} parent=23 // pred_check
          %p190 = pneg %p53
        $region26: #{tpu_custom_call.1} parent=23 // pred_check_branch
          %192 = sbr.rel (%p190) target = $region28
        $region27: #{tpu_custom_call.1} parent=23 // pred_region
          %s193 = sand.u32 %s43, 1
          %s194 = scalar_lea.sflag [#allocation3], %s193
          %s195 = sand.u32 %s43, 1
          %s196 = smul.addr %s195, 16
          %s197 = scalar_lea.vmem [#allocation2], %s196
          %s198 = smul.u32 2, %s27
          %s200 = ssub.s32 256, 256
          %201 = vsyncadd %s194, %s200
          %s202 = smul.addr %s26, 2
          %s203 = sadd.s32 %s198, %s202
          %s204 = smul.addr %s203, 128
          %s205 = scalar_lea.hbm %s0, %s204
          %s206 = sshll.u32 %s197, 4
          %s207 = int_to_ptr.vmem [resolvable:$true] %s206
          %212 = dma.hbm_to_vmem [thread:$0]  %s205, 256, %s207, %s194, 128, 128, 8
        $region28: #{tpu_custom_call.1} parent=23 // pred_fallthru
          _
        // Predicated region
        $region29: #{tpu_custom_call.1} parent=23 // pred_check
          %p213 = pneg %p79
        $region30: #{tpu_custom_call.1} parent=23 // pred_check_branch
          %215 = sbr.rel (%p213) target = $region32
        $region31: #{tpu_custom_call.1} parent=23 // pred_region
          %s216 = sand.u32 %s19, 1
          %s217 = scalar_lea.sflag [#allocation6], %s216
          %s218 = sand.u32 %s69, 1
          %s219 = smul.addr %s218, 16
          %s220 = scalar_lea.vmem [#allocation5], %s219
          %s222 = ssub.s32 256, 256
          %223 = vsyncadd %s217, %s222
          %s224 = smul.addr %s26, 2
          %s225 = smul.addr %s224, 128
          %s226 = scalar_lea.hbm %s1, %s225
          %s227 = sshll.u32 %s220, 4
          %s228 = int_to_ptr.vmem [resolvable:$true] %s227
          %233 = dma.hbm_to_vmem [thread:$0]  %s226, 256, %s228, %s217, 128, 128, 8
        $region32: #{tpu_custom_call.1} parent=23 // pred_fallthru
          _
      $region24: #{tpu_custom_call.1} parent=5 // pred_fallthru
        _
      %p234 = scmp.le.s32.totalorder 1, %s19
      %p235 = scmp.lt.s32.totalorder %s19, 3
      %p236 = pnand %p234, %p235
      %p237 = pneg %p236
      // Predicated region
      $region33: #{tpu_custom_call.1} parent=5 // pred_check
        _
      $region34: #{tpu_custom_call.1} parent=5 // pred_check_branch
        %239 = sbr.rel (%p236) target = $region36
      $region35: #{tpu_custom_call.1} parent=5 // pred_region
        %s240 = ssub.s32 %s19, 1
        %s241 = sand.u32 %s46, 1
        %s242 = scalar_lea.sflag [#allocation3], %s241
        %s243 = sand.u32 %s46, 1
        %s244 = smul.addr %s243, 16
        %s245 = scalar_lea.vmem [#allocation2], %s244
        // Predicated region
        $region37: #{tpu_custom_call.1} parent=35 // pred_check
          %p246 = pneg %p59
        $region38: #{tpu_custom_call.1} parent=35 // pred_check_branch
          %248 = sbr.rel (%p246) target = $region40
        $region39: #{tpu_custom_call.1} parent=35 // pred_region
          %249 = dma.done %s242, 256
        $region40: #{tpu_custom_call.1} parent=35 // pred_fallthru
          _
        %s250 = sand.u32 %s24, 1
        %s251 = scalar_lea.sflag [#allocation6], %s250
        %s252 = sand.u32 %s72, 1
        %s253 = smul.addr %s252, 16
        %s254 = scalar_lea.vmem [#allocation5], %s253
        // Predicated region
        $region41: #{tpu_custom_call.1} parent=35 // pred_check
          %p255 = pneg %p85
        $region42: #{tpu_custom_call.1} parent=35 // pred_check_branch
          %257 = sbr.rel (%p255) target = $region44
        $region43: #{tpu_custom_call.1} parent=35 // pred_region
          %258 = dma.done %s251, 256
        $region44: #{tpu_custom_call.1} parent=35 // pred_fallthru
          _
        // Predicated region
        $region45: #{tpu_custom_call.1} parent=35 // pred_check
          %p259 = pneg %p106
        $region46: #{tpu_custom_call.1} parent=35 // pred_check_branch
          %261 = sbr.rel (%p259) target = $region48
        $region47: #{tpu_custom_call.1} parent=35 // pred_region
          %262 = dma.done [#allocation6], 512
        $region48: #{tpu_custom_call.1} parent=35 // pred_fallthru
          _
        %s263 = sand.u32 %s46, 1
        %s264 = scalar_lea.sflag [#allocation3], %s263
        %s265 = sand.u32 %s46, 1
        %s266 = smul.addr %s265, 16
        %s267 = scalar_lea.vmem [#allocation2], %s266
        %p268 = pneg %p59
        %p269 = pneg %p56
        %s270 = sand.u32 %s24, 1
        %s271 = scalar_lea.sflag [#allocation6], %s270
        %s272 = sand.u32 %s72, 1
        %s273 = smul.addr %s272, 16
        %s274 = scalar_lea.vmem [#allocation5], %s273
        %p275 = pneg %p85
        %p276 = pneg %p82
        %p277 = pneg %p106
        %p278 = pneg %p103
        %p279 = pneg %p127
        %p280 = pneg %p124
        %p281 = pneg %p155
        %p282 = pneg %p152
        %s283 = sand.u32 %s142, 1
        %s284 = scalar_lea.sflag [#allocation4], %s283
        %s285 = sand.u32 %s142, 1
        %s286 = smul.addr %s285, 16
        %s287 = scalar_lea.vmem [#allocation8], %s286
        %s288 = smul.u32 2, %s29
        %s289 = smul.u32 2, %s29
        %v290 = vld [vmem:[#allocation7] sm:$0xff]
        %v291 = vld [vmem:[#allocation7 + $0x8] sm:$0xff]
        %v292 = vld [vmem:[#allocation7 + $0x10] sm:$0xff]
        %v293 = vld [vmem:[#allocation7 + $0x18] sm:$0xff]
        %v294 = vld [vmem:[%s254] sm:$0xff]
        %v295 = vld [vmem:[%s254 + $0x8] sm:$0xff]
        %vm296 = vcmask 261120
        %v298 = vsel %vm296, %v294, 0
        %v301 = vsel %vm296, %v295, 0
        %303 = vmatprep.subr.mxu0 0.0
        %304 = vmatpush1.msra.mxu0 0.0
        %305 = vmatprep.subr.mxu0 0.0
        %306 = vmatpush1.msra.mxu0 0.0
        %307 = vmatprep.subr.mxu0 0.0
        %308 = vmatpush1.msra.mxu0 0.0
        %309 = vmatprep.subr.mxu0 0.0
        %310 = vmatpush1.msra.mxu0 0.0
        %311 = vmatprep.subr.mxu0 0.0
        %312 = vmatpush1.msra.mxu0 0.0
        %313 = vmatprep.subr.mxu0 0.0
        %314 = vmatpush1.msra.mxu0 0.0
        %315 = vmatprep.subr.mxu0 0.0
        %316 = vmatpush1.msra.mxu0 0.0
        %317 = vmatprep.subr.mxu0 0.0
        %318 = vmatpush1.msra.mxu0 0.0
        %319 = vmatprep.subr.mxu0 0.0
        %320 = vmatpush1.msra.mxu0 0.0
        %321 = vmatprep.subr.mxu0 0.0
        %322 = vmatpush1.msra.mxu0 0.0
        %323 = vmatprep.subr.mxu0 0.0
        %324 = vmatpush1.msra.mxu0 0.0
        %325 = vmatprep.subr.mxu0 0.0
        %326 = vmatpush1.msra.mxu0 0.0
        %327 = vmatprep.subr.mxu0 0.0
        %328 = vmatpush1.msra.mxu0 %v293
        %329 = vmatprep.subr.mxu0 0.0
        %330 = vmatpush1.msra.mxu0 %v292
        %331 = vmatprep.subr.mxu0 0.0
        %332 = vmatpush1.msra.mxu0 %v291
        %333 = vmatprep.subr.mxu0 0.0
        %334 = vmatpush1.msra.mxu0 %v290
        %335 = vmatprep.subr.mxu0 0.0
        %336 = vmatpush2.msra.mxu0 0.0
        %337 = vmatprep.subr.mxu0 0.0
        %338 = vmatpush2.msra.mxu0 0.0
        %339 = vmatprep.subr.mxu0 0.0
        %340 = vmatpush2.msra.mxu0 0.0
        %341 = vmatprep.subr.mxu0 0.0
        %342 = vmatpush2.msra.mxu0 0.0
        %343 = vmatprep.subr.mxu0 0.0
        %344 = vmatpush2.msra.mxu0 0.0
        %345 = vmatprep.subr.mxu0 0.0
        %346 = vmatpush2.msra.mxu0 0.0
        %347 = vmatprep.subr.mxu0 0.0
        %348 = vmatpush2.msra.mxu0 0.0
        %349 = vmatprep.subr.mxu0 0.0
        %350 = vmatpush2.msra.mxu0 0.0
        %351 = vmatprep.subr.mxu0 0.0
        %352 = vmatpush2.msra.mxu0 0.0
        %353 = vmatprep.subr.mxu0 0.0
        %354 = vmatpush2.msra.mxu0 0.0
        %355 = vmatprep.subr.mxu0 0.0
        %356 = vmatpush2.msra.mxu0 0.0
        %357 = vmatprep.subr.mxu0 0.0
        %358 = vmatpush2.msra.mxu0 0.0
        %359 = vmatprep.subr.mxu0 0.0
        %360 = vmatpush2.msra.mxu0 0.0
        %361 = vmatprep.subr.mxu0 0.0
        %362 = vmatpush2.msra.mxu0 0.0
        %363 = vmatprep.subr.mxu0 0.0
        %364 = vmatpush2.msra.mxu0 0.0
        %365 = vmatprep.subr.mxu0 0.0
        %366 = vmatpush2.msra.mxu0 0.0
        %367 = vmatprep.mubr.f32.mxu0 0.0
        %368 = vmatmul.mubr.f32.gmra.mxu0 %v298
        %v369 = vpop.f32.mrf.mxu0
        %v370 = vadd.f32 0.0, %v369
        %v371 = vpop.f32.mrf.mxu0
        %372 = vmatprep.mubr.f32.mxu0 0.0
        %373 = vmatmul.mubr.f32.gmra.mxu0 %v301
        %v374 = vpop.f32.mrf.mxu0
        %v375 = vadd.f32 0.0, %v374
        %v376 = vpop.f32.mrf.mxu0
        %377 = vdwg.mxu0
        %v378 = vld [vmem:[%s245] sm:$0xff]
        %v379 = vld [vmem:[%s245 + $0x8] sm:$0xff]
        %v380 = vld [vmem:[%s3] sm:$0x1]
        %v382 = vlaneseq
        %v383 = vshrl.u32 %v382, 7
        %v384 = vsub.s32 0, %v383
        %v385 = vrot.slane %v380, %v384
        %vm387 = vcmask 130048
        %v389 = vsel %vm387, %v378, 0
        %v392 = vsel %vm387, %v379, 0
        %394 = vmatprep.subr.mxu0 0.0
        %395 = vmatpush1.msra.mxu0 0.0
        %396 = vmatprep.subr.mxu0 0.0
        %397 = vmatpush1.msra.mxu0 0.0
        %398 = vmatprep.subr.mxu0 0.0
        %399 = vmatpush1.msra.mxu0 0.0
        %400 = vmatprep.subr.mxu0 0.0
        %401 = vmatpush1.msra.mxu0 0.0
        %402 = vmatprep.subr.mxu0 0.0
        %403 = vmatpush1.msra.mxu0 0.0
        %404 = vmatprep.subr.mxu0 0.0
        %405 = vmatpush1.msra.mxu0 0.0
        %406 = vmatprep.subr.mxu0 0.0
        %407 = vmatpush1.msra.mxu0 0.0
        %408 = vmatprep.subr.mxu0 0.0
        %409 = vmatpush1.msra.mxu0 0.0
        %410 = vmatprep.subr.mxu0 0.0
        %411 = vmatpush1.msra.mxu0 0.0
        %412 = vmatprep.subr.mxu0 0.0
        %413 = vmatpush1.msra.mxu0 0.0
        %414 = vmatprep.subr.mxu0 0.0
        %415 = vmatpush1.msra.mxu0 0.0
        %416 = vmatprep.subr.mxu0 0.0
        %417 = vmatpush1.msra.mxu0 0.0
        %418 = vmatprep.subr.mxu0 0.0
        %419 = vmatpush1.msra.mxu0 0.0
        %420 = vmatprep.subr.mxu0 0.0
        %421 = vmatpush1.msra.mxu0 0.0
        %422 = vmatprep.subr.mxu0 0.0
        %423 = vmatpush1.msra.mxu0 %v375
        %424 = vmatprep.subr.mxu0 0.0
        %425 = vmatpush1.msra.mxu0 %v370
        %426 = vmatprep.subr.mxu0 0.0
        %427 = vmatpush2.msra.mxu0 0.0
        %428 = vmatprep.subr.mxu0 0.0
        %429 = vmatpush2.msra.mxu0 0.0
        %430 = vmatprep.subr.mxu0 0.0
        %431 = vmatpush2.msra.mxu0 0.0
        %432 = vmatprep.subr.mxu0 0.0
        %433 = vmatpush2.msra.mxu0 0.0
        %434 = vmatprep.subr.mxu0 0.0
        %435 = vmatpush2.msra.mxu0 0.0
        %436 = vmatprep.subr.mxu0 0.0
        %437 = vmatpush2.msra.mxu0 0.0
        %438 = vmatprep.subr.mxu0 0.0
        %439 = vmatpush2.msra.mxu0 0.0
        %440 = vmatprep.subr.mxu0 0.0
        %441 = vmatpush2.msra.mxu0 0.0
        %442 = vmatprep.subr.mxu0 0.0
        %443 = vmatpush2.msra.mxu0 0.0
        %444 = vmatprep.subr.mxu0 0.0
        %445 = vmatpush2.msra.mxu0 0.0
        %446 = vmatprep.subr.mxu0 0.0
        %447 = vmatpush2.msra.mxu0 0.0
        %448 = vmatprep.subr.mxu0 0.0
        %449 = vmatpush2.msra.mxu0 0.0
        %450 = vmatprep.subr.mxu0 0.0
        %451 = vmatpush2.msra.mxu0 0.0
        %452 = vmatprep.subr.mxu0 0.0
        %453 = vmatpush2.msra.mxu0 0.0
        %454 = vmatprep.subr.mxu0 0.0
        %455 = vmatpush2.msra.mxu0 0.0
        %456 = vmatprep.subr.mxu0 0.0
        %457 = vmatpush2.msra.mxu0 0.0
        %458 = vmatprep.mubr.f32.mxu0 0.0
        %459 = vmatmul.mubr.f32.gmra.mxu0 %v389
        %v460 = vpop.f32.mrf.mxu0
        %v461 = vadd.f32 %v385, %v460
        %v462 = vpop.f32.mrf.mxu0
        %463 = vmatprep.mubr.f32.mxu0 0.0
        %464 = vmatmul.mubr.f32.gmra.mxu0 %v392
        %v465 = vpop.f32.mrf.mxu0
        %v466 = vadd.f32 %v385, %v465
        %v467 = vpop.f32.mrf.mxu0
        %468 = vdwg.mxu0
        %469 = vst.msk [vmem:[%s287] sm:$0xff] %vm296, %v461
        %470 = vst.msk [vmem:[%s287 + $0x8] sm:$0xff] %vm296, %v466
        %s471 = sand.u32 %s142, 1
        %s472 = scalar_lea.sflag [#allocation4], %s471
        %s473 = sand.u32 %s142, 1
        %s474 = smul.addr %s473, 16
        %s475 = scalar_lea.vmem [#allocation8], %s474
        // Predicated region
        $region49: #{tpu_custom_call.1} parent=35 // pred_check
          %p476 = pneg %p152
        $region50: #{tpu_custom_call.1} parent=35 // pred_check_branch
          %478 = sbr.rel (%p476) target = $region52
        $region51: #{tpu_custom_call.1} parent=35 // pred_region
          %s479 = smul.u32 2, %s29
          %s481 = ssub.s32 256, 256
          %482 = vsyncadd %s472, %s481
          %s483 = smul.addr %s28, 2
          %s484 = sadd.s32 %s479, %s483
          %s485 = smul.addr %s484, 128
          %s486 = scalar_lea.hbm %s4, %s485
          %s487 = sshll.u32 %s475, 4
          %s488 = int_to_ptr.vmem [resolvable:$true] %s487
          %493 = dma.vmem_to_hbm [thread:$0]  %s488, 256, %s486, %s472, 128, 128, 8
        $region52: #{tpu_custom_call.1} parent=35 // pred_fallthru
          _
      $region36: #{tpu_custom_call.1} parent=5 // pred_fallthru
        _
      %p494 = scmp.le.s32.totalorder 2, %s19
      // Predicated region
      $region53: #{tpu_custom_call.1} parent=5 // pred_check
        %p495 = pneg %p494
      $region54: #{tpu_custom_call.1} parent=5 // pred_check_branch
        %497 = sbr.rel (%p495) target = $region56
      $region55: #{tpu_custom_call.1} parent=5 // pred_region
        %s498 = ssub.s32 %s19, 2
        // Predicated region
        $region57: #{tpu_custom_call.1} parent=55 // pred_check
          %p499 = pneg %p158
        $region58: #{tpu_custom_call.1} parent=55 // pred_check_branch
          %501 = sbr.rel (%p499) target = $region60
        $region59: #{tpu_custom_call.1} parent=55 // pred_region
          %s502 = sand.u32 %s143, 1
          %s503 = scalar_lea.sflag [#allocation4], %s502
          %s504 = sand.u32 %s143, 1
          %s505 = smul.addr %s504, 16
          %s506 = scalar_lea.vmem [#allocation8], %s505
          %507 = dma.done %s503, 256
        $region60: #{tpu_custom_call.1} parent=55 // pred_fallthru
          _
      $region56: #{tpu_custom_call.1} parent=5 // pred_fallthru
        _
    $region6: #{tpu_custom_call.1} parent=1 // loop_footer
      %s23 = sadd.s32 1, %s19
    $region7: #{tpu_custom_call.1} parent=1 // loop_footer_branch
      %18 = sbr.rel target = $region3
    $region8: #{tpu_custom_call.1} parent=1 // loop_exit
      _
    %508 = vsyncpa [#allocation3], 1
    %s509 = scalar_lea.sflag [#allocation3], 1
    %510 = vsyncpa %s509, 1
    %511 = vsyncpa [#allocation6], 1
    %s512 = scalar_lea.sflag [#allocation6], 1
    %513 = vsyncpa %s512, 1
    %514 = vsyncpa [#allocation4], 1
    %s515 = scalar_lea.sflag [#allocation4], 1
    %516 = vsyncpa %s515, 1

</llo_original>
